<compile_context>
chip_gen: v7x
topology: tpu7x:2x2x1
jax: 0.10.0
libtpu: 0.0.40
codegen_flags: <defaults>
</compile_context>

<pallas_src>
from functools import partial

import jax
import jax.numpy as jnp
from jax.experimental import pallas as pl
from jax.experimental.pallas import tpu as pltpu


_MAX_TM = 256          # batch-tile rows (full MXU M occupancy on v6e/v7x)
_LANE = 128            # lane width / MXU N granularity


def _round_up(n, m=_LANE):
    return ((n + m - 1) // m) * m


# ----------------------------------------------------------------------------
# Pallas kernel: whole MLP (ReLU(Linear) x N, activate_final=True) in one call
# ----------------------------------------------------------------------------
def _fused_mlp_kernel(*refs):
    """refs = (x_ref, w0_ref, b0_ref, w1_ref, b1_ref, ..., o_ref).

    Grid axis 0 tiles the batch ("parallel"); weights/biases have constant
    index_maps so they stay VMEM-resident across batch tiles.
    Per layer:  h = ReLU(h @ W + b)
      - matmul on the MXU with bf16 inputs / f32 accumulation,
      - bias-add + ReLU as f32 VPU epilogue (free slots under the MXU drain).
    Intermediate activations never leave VMEM/vregs; only the final padded
    lane-dense (tm, H_last_padded) tile pays an (unmasked) store.
    """
    x_ref, o_ref = refs[0], refs[-1]
    param_refs = refs[1:-1]
    n_layers = len(param_refs) // 2

    # In-kernel cast of the activation tile (VPU, hides under the MXU drain).
    h = x_ref[...].astype(jnp.bfloat16)               # (tm, D_padded)
    for i in range(n_layers):
        w = param_refs[2 * i][...]                    # bf16 (D_i, H_i) padded
        b = param_refs[2 * i + 1][...]                # f32  (1, H_i)  padded
        acc = jnp.dot(h, w, preferred_element_type=jnp.float32)
        acc = jnp.maximum(acc + b, 0.0)               # f32 bias + ReLU (VPU)
        if i + 1 < n_layers:
            h = acc.astype(jnp.bfloat16)              # feed next MXU layer
        else:
            o_ref[...] = acc.astype(o_ref.dtype)


def fused_mlp(x, weights, biases):
    """ReLU-MLP (activate_final=True) fused into a single Pallas kernel.

    x: (B, D_padded) f32; weights[i]: bf16 (D_i, H_i) 128-padded;
    biases[i]: f32 (1, H_i) 128-padded. Output f32 (B, H_last_padded).
    """
    B, D = x.shape
    tm = B if B <= _MAX_TM else _MAX_TM
    grid = (pl.cdiv(B, tm),)

    args = [x]
    in_specs = [pl.BlockSpec((tm, D), lambda i: (i, 0))]
    for w, b in zip(weights, biases):
        args.append(w)
        in_specs.append(pl.BlockSpec(w.shape, lambda i: (0, 0)))
        args.append(b)
        in_specs.append(pl.BlockSpec(b.shape, lambda i: (0, 0)))

    h_out = weights[-1].shape[1]
    return pl.pallas_call(
        _fused_mlp_kernel,
        out_shape=jax.ShapeDtypeStruct((B, h_out), jnp.float32),
        grid=grid,
        in_specs=in_specs,
        out_specs=pl.BlockSpec((tm, h_out), lambda i: (i, 0)),
        compiler_params=pltpu.CompilerParams(
            dimension_semantics=("parallel",)),
    )(*args)


@partial(jax.jit, static_argnums=(3, 4))
def _forward_impl(x, weights, biases, d_padded, out_dim):
    # nn.Flatten(start_dim=1, end_dim=-1): identical row-major reshape in JAX.
    x = x.reshape(x.shape[0], -1)
    if x.shape[1] != d_padded:                # pad flatten dim to 128 lanes
        x = jnp.pad(x, ((0, 0), (0, d_padded - x.shape[1])))
    y_padded = fused_mlp(x, weights, biases)  # (B, H_last_padded) lane-dense
    return y_padded[:, :out_dim]              # slice off zero padding (in-jit)


# ----------------------------------------------------------------------------
# SharedEncoder ('multi' path): Flatten + MLP(hidden_dims=n_enc, ReLU,
#                               activate_final=True)
# ----------------------------------------------------------------------------
class SharedEncoder:
    def __init__(self, in_dims, n_enc, enc_strides, encoder_type, key):
        if encoder_type != "multi":
            # TODO(synk): 'conv' path (SharedConvModule) not translatable
            # without its source.
            raise NotImplementedError(
                "Only encoder_type='multi' is implemented in this Pallas port."
            )
        self._encoder_type = encoder_type
        self.conv_shapes = None

        # Deterministic init matching torch nn.Linear's U(-1/sqrt(fan_in), ..)
        # (weights stored transposed as (in, out) for the x @ W convention).
        dims = [in_dims] + list(n_enc)
        self.weights = []    # f32, unpadded (source-of-truth params)
        self.biases = []
        for i in range(len(n_enc)):
            key, wk, bk = jax.random.split(key, 3)
            bound = 1.0 / jnp.sqrt(dims[i])
            w = jax.random.uniform(
                wk, (dims[i], dims[i + 1]), jnp.float32, -bound, bound
            )
            b = jax.random.uniform(bk, (dims[i + 1],), jnp.float32, -bound, bound)
            self.weights.append(w)
            self.biases.append(b)

        # Pre-cast to bf16 and zero-pad to 128-lane multiples ONCE so the
        # forward pass does no per-call convert/pad work and all MXU tiles
        # and output stores are lane-dense.
        padded = [_round_up(d) for d in dims]
        self._weights_dev = []
        self._biases_dev = []
        for i, (w, b) in enumerate(zip(self.weights, self.biases)):
            wp = jnp.zeros((padded[i], padded[i + 1]), jnp.bfloat16)
            wp = wp.at[: w.shape[0], : w.shape[1]].set(w.astype(jnp.bfloat16))
            bp = jnp.zeros((1, padded[i + 1]), jnp.float32)
            bp = bp.at[0, : b.shape[0]].set(b)
            self._weights_dev.append(wp)
            self._biases_dev.append(bp)
        self._d_padded = padded[0]
        self._out_dim = int(n_enc[-1])

    def __call__(self, x):
        # Python-side attribute only; mutated outside the jitted computation.
        self.conv_shapes = None
        return _forward_impl(
            x,
            tuple(self._weights_dev),
            tuple(self._biases_dev),
            self._d_padded,
            self._out_dim,
        )


# ----------------------------------------------------------------------------
# Pure-JAX references for correctness checking
# ----------------------------------------------------------------------------
def _reference_forward_f32(x, weights, biases):
    h = x.reshape(x.shape[0], -1).astype(jnp.float32)
    for w, b in zip(weights, biases):
        h = jnp.maximum(h @ w + b, 0.0)
    return h


def _reference_forward_bf16(x, weights, biases):
    """Mirrors the kernel's bf16-input / f32-accumulate compute path."""
    h = x.reshape(x.shape[0], -1).astype(jnp.bfloat16)
    for i, (w, b) in enumerate(zip(weights, biases)):
        acc = jnp.dot(h, w.astype(jnp.bfloat16),
                      preferred_element_type=jnp.float32)
        acc = jnp.maximum(acc + b.astype(jnp.float32), 0.0)
        h = acc.astype(jnp.bfloat16) if i + 1 < len(weights) else acc
    return h


if __name__ == "__main__":
    key = jax.random.PRNGKey(0)
    key, xk, pk = jax.random.split(key, 3)

    # Small shapes consistent with the module: NCHW input, flattened by 'multi'.
    B, C, H, W = 2, 4, 16, 16
    x = jax.random.normal(xk, (B, C, H, W), dtype=jnp.float32)

    in_dims = C * H * W          # 1024 after flatten
    n_enc = [64, 32]             # hidden units per layer
    enc_strides = [1, 1]         # unused for 'multi'

    enc = SharedEncoder(in_dims, n_enc, enc_strides, "multi", pk)

    out = jax.block_until_ready(enc(x))

    ref_bf16 = jax.block_until_ready(
        _reference_forward_bf16(x, enc.weights, enc.biases))
    ref_f32 = jax.block_until_ready(
        _reference_forward_f32(x, enc.weights, enc.biases))

    assert out.shape == (B, n_enc[-1]), out.shape
    # Tight check against the same bf16-in / f32-acc compute path.
    assert jnp.allclose(out, ref_bf16, atol=1e-3, rtol=1e-3), \
        "mismatch vs bf16 reference"
    # Loose check against full-f32 math (bf16 inputs over D=1024 reduction).
    # TODO(synk): if downstream needs full f32 fidelity, keep activations f32
    # (bf16 weights only) at some MXU-throughput cost.
    assert jnp.allclose(out, ref_f32, atol=5e-2, rtol=5e-2), \
        "mismatch vs f32 reference"

    print("KERNEL_OK")
</pallas_src>

<mosaic_0001>
module attributes {stable_mosaic.version = 11 : i64} {
  func.func @_fused_mlp_kernel(%arg0: i32, %arg1: memref<2x1024xf32, #tpu.memory_space<vmem>>, %arg2: memref<1024x128xbf16, #tpu.memory_space<vmem>>, %arg3: memref<1x128xf32, #tpu.memory_space<vmem>>, %arg4: memref<128x128xbf16, #tpu.memory_space<vmem>>, %arg5: memref<1x128xf32, #tpu.memory_space<vmem>>, %arg6: memref<2x128xf32, #tpu.memory_space<vmem>>) attributes {dimension_semantics = [#tpu.dimension_semantics<parallel>], iteration_bounds = array<i64: 1>, scalar_prefetch = 0 : i64, scratch_operands = 0 : i64, tpu.core_type = #tpu.core_type<tc>, window_params = [{transform_indices = @transform_0, window_bounds = array<i64: 2, 1024>}, {pipeline_mode = #tpu.pipeline_mode<synchronous>, transform_indices = @transform_1, window_bounds = array<i64: 1024, 128>}, {pipeline_mode = #tpu.pipeline_mode<synchronous>, transform_indices = @transform_2, window_bounds = array<i64: 1, 128>}, {pipeline_mode = #tpu.pipeline_mode<synchronous>, transform_indices = @transform_3, window_bounds = array<i64: 128, 128>}, {pipeline_mode = #tpu.pipeline_mode<synchronous>, transform_indices = @transform_4, window_bounds = array<i64: 1, 128>}, {transform_indices = @transform_5, window_bounds = array<i64: 2, 128>}]} {
    %c0 = arith.constant 0 : index
    %c0_0 = arith.constant 0 : index
    %0 = vector.load %arg1[%c0, %c0_0] : memref<2x1024xf32, #tpu.memory_space<vmem>>, vector<2x1024xf32>
    %1 = arith.truncf %0 : vector<2x1024xf32> to vector<2x1024xbf16>
    %c0_1 = arith.constant 0 : index
    %c0_2 = arith.constant 0 : index
    %2 = vector.load %arg2[%c0_1, %c0_2] : memref<1024x128xbf16, #tpu.memory_space<vmem>>, vector<1024x128xbf16>
    %c0_3 = arith.constant 0 : index
    %c0_4 = arith.constant 0 : index
    %3 = vector.load %arg3[%c0_3, %c0_4] : memref<1x128xf32, #tpu.memory_space<vmem>>, vector<1x128xf32>
    %cst = arith.constant dense<0.000000e+00> : vector<2x128xf32>
    %4 = tpu.matmul %1, %2, %cst {dimension_numbers = #tpu.dot_dimension_numbers<[1], [0], [0], [1], [0, 0, 1, 1], [], []>} : vector<2x1024xbf16>, vector<1024x128xbf16>, vector<2x128xf32> -> vector<2x128xf32>
    %5 = vector.broadcast %3 : vector<1x128xf32> to vector<2x128xf32>
    %6 = arith.addf %4, %5 : vector<2x128xf32>
    %cst_5 = arith.constant 0.000000e+00 : f32
    %7 = vector.broadcast %cst_5 : f32 to vector<2x128xf32>
    %8 = arith.maximumf %6, %7 : vector<2x128xf32>
    %9 = arith.truncf %8 : vector<2x128xf32> to vector<2x128xbf16>
    %c0_6 = arith.constant 0 : index
    %c0_7 = arith.constant 0 : index
    %10 = vector.load %arg4[%c0_6, %c0_7] : memref<128x128xbf16, #tpu.memory_space<vmem>>, vector<128x128xbf16>
    %c0_8 = arith.constant 0 : index
    %c0_9 = arith.constant 0 : index
    %11 = vector.load %arg5[%c0_8, %c0_9] : memref<1x128xf32, #tpu.memory_space<vmem>>, vector<1x128xf32>
    %cst_10 = arith.constant dense<0.000000e+00> : vector<2x128xf32>
    %12 = tpu.matmul %9, %10, %cst_10 {dimension_numbers = #tpu.dot_dimension_numbers<[1], [0], [0], [1], [0, 0, 1, 1], [], []>} : vector<2x128xbf16>, vector<128x128xbf16>, vector<2x128xf32> -> vector<2x128xf32>
    %13 = vector.broadcast %11 : vector<1x128xf32> to vector<2x128xf32>
    %14 = arith.addf %12, %13 : vector<2x128xf32>
    %cst_11 = arith.constant 0.000000e+00 : f32
    %15 = vector.broadcast %cst_11 : f32 to vector<2x128xf32>
    %16 = arith.maximumf %14, %15 : vector<2x128xf32>
    %c0_12 = arith.constant 0 : index
    %c0_13 = arith.constant 0 : index
    %17 = vector.load %arg6[%c0_12, %c0_13] : memref<2x128xf32, #tpu.memory_space<vmem>>, vector<2x128xf32>
    tpu.vector_store %arg6[%c0_12, %c0_13], %16 {strides = array<i32>} : memref<2x128xf32, #tpu.memory_space<vmem>>, vector<2x128xf32>,
    return
  }
  func.func @transform_0(%arg0: i32) -> (i32, i32) {
    %c0_i32 = arith.constant 0 : i32
    %c0_i32_0 = arith.constant 0 : i32
    return %arg0, %c0_i32 : i32, i32
  }
  func.func @transform_1(%arg0: i32) -> (i32, i32) {
    %c0_i32 = arith.constant 0 : i32
    %c0_i32_0 = arith.constant 0 : i32
    %c0_i32_1 = arith.constant 0 : i32
    return %c0_i32, %c0_i32_0 : i32, i32
  }
  func.func @transform_2(%arg0: i32) -> (i32, i32) {
    %c0_i32 = arith.constant 0 : i32
    %c0_i32_0 = arith.constant 0 : i32
    %c0_i32_1 = arith.constant 0 : i32
    return %c0_i32, %c0_i32_0 : i32, i32
  }
  func.func @transform_3(%arg0: i32) -> (i32, i32) {
    %c0_i32 = arith.constant 0 : i32
    %c0_i32_0 = arith.constant 0 : i32
    %c0_i32_1 = arith.constant 0 : i32
    return %c0_i32, %c0_i32_0 : i32, i32
  }
  func.func @transform_4(%arg0: i32) -> (i32, i32) {
    %c0_i32 = arith.constant 0 : i32
    %c0_i32_0 = arith.constant 0 : i32
    %c0_i32_1 = arith.constant 0 : i32
    return %c0_i32, %c0_i32_0 : i32, i32
  }
  func.func @transform_5(%arg0: i32) -> (i32, i32) {
    %c0_i32 = arith.constant 0 : i32
    %c0_i32_0 = arith.constant 0 : i32
    return %arg0, %c0_i32 : i32, i32
  }
}

</mosaic_0001>

<llo_original>
// kernel: _forward_impl.1
$region0: #{_forward_impl.1}
  #allocation0 [shape = 'u32[]', space=smem, size = 0x4, offset = 0x4, fixed_abs, tag = 'smem constant byte address 0x4 - core index']
  #allocation1 [shape = 'u32[144,128]{1,0:T(1,128)}', space=vmem, size = 0x12000, scoped, tag = 'internal scratch']
  %s0 = inlined_call_operand.vmem [shape: f32[2,1024], index: 0, kind: input, shape index: {}]
  %s1 = inlined_call_operand.hbm [shape: bf16[1024,128], index: 1, kind: input, shape index: {}]
  %s2 = inlined_call_operand.vmem [shape: f32[1,128], index: 2, kind: input, shape index: {}]
  %s3 = inlined_call_operand.vmem [shape: bf16[128,128], index: 3, kind: input, shape index: {}]
  %s4 = inlined_call_operand.vmem [shape: f32[1,128], index: 4, kind: input, shape index: {}]
  %s5 = inlined_call_operand.hbm [shape: f32[2,128], index: 5, kind: output, shape index: {}]
  %s6 = sld [smem:[#allocation0]]
  $region34: #{_forward_impl.1} parent=0
    _
  %s8 = ssub.s32 1, %s6
  %s9 = scalar_select 0, %s8, %s6
  $region1: #{_forward_impl.1} parent=0
    #allocation2 [shape = 'u8[262144]{0}', space=vmem, size = 0x40000, scoped, tag = 'input window, operand 1, single buffered']
    #allocation3 [shape = 's32[1]{0}', space=sflag, size = 0x4, scoped, tag = 'scoped memory for _forward_impl.1']
    #allocation4 [shape = 's32[1]{0}', space=sflag, size = 0x4, scoped, tag = 'scoped memory for _forward_impl.1']
    #allocation5 [shape = 'u8[1024]{0}', space=vmem, size = 0x400, scoped, tag = 'output window, operand 0, single buffered']
    %10 = vsyncpa [#allocation3], 0
    %11 = vsyncpa [#allocation4], 0
    // Predicated region
    $region2: #{_forward_impl.1} parent=1 // pred_check
      _
    $region3: #{_forward_impl.1} parent=1 // pred_check_branch
      %13 = sbr.rel (0) target = $region5
    $region4: #{_forward_impl.1} parent=1 // pred_region
      _
    $region5: #{_forward_impl.1} parent=1 // pred_fallthru
      _
    // Predicated region
    $region6: #{_forward_impl.1} parent=1 // pred_check
      _
    $region7: #{_forward_impl.1} parent=1 // pred_check_branch
      %15 = sbr.rel (0) target = $region9
    $region8: #{_forward_impl.1} parent=1 // pred_region
      %s17 = ssub.s32 8192, 8192
      %18 = vsyncadd [#allocation3], %s17
      %s19 = sshll.u32 [#allocation2], 4
      %s20 = int_to_ptr.vmem [resolvable:$true] %s19
      %25 = dma.hbm_to_vmem [thread:$0]  %s1, 8192, %s20, [#allocation3], 64, 64, 4
    $region9: #{_forward_impl.1} parent=1 // pred_fallthru
      _
    // Predicated region
    $region10: #{_forward_impl.1} parent=1 // pred_check
      _
    $region11: #{_forward_impl.1} parent=1 // pred_check_branch
      %27 = sbr.rel (0) target = $region13
    $region12: #{_forward_impl.1} parent=1 // pred_region
      _
    $region13: #{_forward_impl.1} parent=1 // pred_fallthru
      _
    // Predicated region
    $region14: #{_forward_impl.1} parent=1 // pred_check
      _
    $region15: #{_forward_impl.1} parent=1 // pred_check_branch
      %29 = sbr.rel (0) target = $region17
    $region16: #{_forward_impl.1} parent=1 // pred_region
      _
    $region17: #{_forward_impl.1} parent=1 // pred_fallthru
      _
    // Predicated region
    $region18: #{_forward_impl.1} parent=1 // pred_check
      _
    $region19: #{_forward_impl.1} parent=1 // pred_check_branch
      %31 = sbr.rel (0) target = $region21
    $region20: #{_forward_impl.1} parent=1 // pred_region
      _
    $region21: #{_forward_impl.1} parent=1 // pred_fallthru
      _
    // Predicated region
    $region22: #{_forward_impl.1} parent=1 // pred_check
      _
    $region23: #{_forward_impl.1} parent=1 // pred_check_branch
      %33 = sbr.rel (0) target = $region25
    $region24: #{_forward_impl.1} parent=1 // pred_region
      %34 = dma.done [#allocation3], 8192
    $region25: #{_forward_impl.1} parent=1 // pred_fallthru
      _
    %v36 = vld [vmem:[%s0] sm:$0xff]
    %v37 = vld [vmem:[%s0 + $0x8] sm:$0xff]
    %v40 = vcombine.high %v36, %v36
    %v42 = vunpack.c.l.s4 1983009808
    %v43 = vunpack.c.0.s8 %v42
    %v44 = vlaneseq
    %v45 = vshrl.u32 %v44, 7
    %v46 = vsub.s32 %v43, %v45
    %v47 = vrot.slane %v36, %v46
    %v49 = vunpack.c.l.s4 1983009808
    %v50 = vunpack.c.0.s8 %v49
    %v51 = vlaneseq
    %v52 = vshrl.u32 %v51, 7
    %v53 = vsub.s32 %v50, %v52
    %v54 = vrot.slane %v40, %v53
    %v55 = vcombine.high %v47, %v47
    %v56 = vcombine.high %v54, %v54
    %v57 = vcombine.high %v37, %v37
    %v59 = vunpack.c.l.s4 1983009808
    %v60 = vunpack.c.0.s8 %v59
    %v61 = vlaneseq
    %v62 = vshrl.u32 %v61, 7
    %v63 = vsub.s32 %v60, %v62
    %v64 = vrot.slane %v37, %v63
    %v66 = vunpack.c.l.s4 1983009808
    %v67 = vunpack.c.0.s8 %v66
    %v68 = vlaneseq
    %v69 = vshrl.u32 %v68, 7
    %v70 = vsub.s32 %v67, %v69
    %v71 = vrot.slane %v57, %v70
    %v72 = vcombine.high %v64, %v64
    %v73 = vcombine.high %v71, %v71
    %v82 = vpack.c.bf16 %v47, %v47
    %v83 = vpack.c.bf16 %v55, %v55
    %v84 = vpack.c.bf16 %v54, %v54
    %v85 = vpack.c.bf16 %v56, %v56
    %v86 = vpack.c.bf16 %v64, %v64
    %v87 = vpack.c.bf16 %v72, %v72
    %v88 = vpack.c.bf16 %v71, %v71
    %v89 = vpack.c.bf16 %v73, %v73
    %v90 = vld [vmem:[#allocation2] sm:$0xf]
    %v91 = vld [vmem:[#allocation2 + $0x4] sm:$0xf]
    %v92 = vld [vmem:[#allocation2 + $0x8] sm:$0xf]
    %v93 = vld [vmem:[#allocation2 + $0xc] sm:$0xf]
    %v94 = vld [vmem:[#allocation2 + $0x10] sm:$0xf]
    %v95 = vld [vmem:[#allocation2 + $0x14] sm:$0xf]
    %v96 = vld [vmem:[#allocation2 + $0x18] sm:$0xf]
    %v97 = vld [vmem:[#allocation2 + $0x1c] sm:$0xf]
    %v98 = vld [vmem:[#allocation2 + $0x20] sm:$0xf]
    %v99 = vld [vmem:[#allocation2 + $0x24] sm:$0xf]
    %v100 = vld [vmem:[#allocation2 + $0x28] sm:$0xf]
    %v101 = vld [vmem:[#allocation2 + $0x2c] sm:$0xf]
    %v102 = vld [vmem:[#allocation2 + $0x30] sm:$0xf]
    %v103 = vld [vmem:[#allocation2 + $0x34] sm:$0xf]
    %v104 = vld [vmem:[#allocation2 + $0x38] sm:$0xf]
    %v105 = vld [vmem:[#allocation2 + $0x3c] sm:$0xf]
    %v106 = vld [vmem:[#allocation2 + $0x40] sm:$0xf]
    %v107 = vld [vmem:[#allocation2 + $0x44] sm:$0xf]
    %v108 = vld [vmem:[#allocation2 + $0x48] sm:$0xf]
    %v109 = vld [vmem:[#allocation2 + $0x4c] sm:$0xf]
    %v110 = vld [vmem:[#allocation2 + $0x50] sm:$0xf]
    %v111 = vld [vmem:[#allocation2 + $0x54] sm:$0xf]
    %v112 = vld [vmem:[#allocation2 + $0x58] sm:$0xf]
    %v113 = vld [vmem:[#allocation2 + $0x5c] sm:$0xf]
    %v114 = vld [vmem:[#allocation2 + $0x60] sm:$0xf]
    %v115 = vld [vmem:[#allocation2 + $0x64] sm:$0xf]
    %v116 = vld [vmem:[#allocation2 + $0x68] sm:$0xf]
    %v117 = vld [vmem:[#allocation2 + $0x6c] sm:$0xf]
    %v118 = vld [vmem:[#allocation2 + $0x70] sm:$0xf]
    %v119 = vld [vmem:[#allocation2 + $0x74] sm:$0xf]
    %v120 = vld [vmem:[#allocation2 + $0x78] sm:$0xf]
    %v121 = vld [vmem:[#allocation2 + $0x7c] sm:$0xf]
    %v122 = vld [vmem:[#allocation2 + $0x80] sm:$0xf]
    %v123 = vld [vmem:[#allocation2 + $0x84] sm:$0xf]
    %v124 = vld [vmem:[#allocation2 + $0x88] sm:$0xf]
    %v125 = vld [vmem:[#allocation2 + $0x8c] sm:$0xf]
    %v126 = vld [vmem:[#allocation2 + $0x90] sm:$0xf]
    %v127 = vld [vmem:[#allocation2 + $0x94] sm:$0xf]
    %v128 = vld [vmem:[#allocation2 + $0x98] sm:$0xf]
    %v129 = vld [vmem:[#allocation2 + $0x9c] sm:$0xf]
    %v130 = vld [vmem:[#allocation2 + $0xa0] sm:$0xf]
    %v131 = vld [vmem:[#allocation2 + $0xa4] sm:$0xf]
    %v132 = vld [vmem:[#allocation2 + $0xa8] sm:$0xf]
    %v133 = vld [vmem:[#allocation2 + $0xac] sm:$0xf]
    %v134 = vld [vmem:[#allocation2 + $0xb0] sm:$0xf]
    %v135 = vld [vmem:[#allocation2 + $0xb4] sm:$0xf]
    %v136 = vld [vmem:[#allocation2 + $0xb8] sm:$0xf]
    %v137 = vld [vmem:[#allocation2 + $0xbc] sm:$0xf]
    %v138 = vld [vmem:[#allocation2 + $0xc0] sm:$0xf]
    %v139 = vld [vmem:[#allocation2 + $0xc4] sm:$0xf]
    %v140 = vld [vmem:[#allocation2 + $0xc8] sm:$0xf]
    %v141 = vld [vmem:[#allocation2 + $0xcc] sm:$0xf]
    %v142 = vld [vmem:[#allocation2 + $0xd0] sm:$0xf]
    %v143 = vld [vmem:[#allocation2 + $0xd4] sm:$0xf]
    %v144 = vld [vmem:[#allocation2 + $0xd8] sm:$0xf]
    %v145 = vld [vmem:[#allocation2 + $0xdc] sm:$0xf]
    %v146 = vld [vmem:[#allocation2 + $0xe0] sm:$0xf]
    %v147 = vld [vmem:[#allocation2 + $0xe4] sm:$0xf]
    %v148 = vld [vmem:[#allocation2 + $0xe8] sm:$0xf]
    %v149 = vld [vmem:[#allocation2 + $0xec] sm:$0xf]
    %v150 = vld [vmem:[#allocation2 + $0xf0] sm:$0xf]
    %v151 = vld [vmem:[#allocation2 + $0xf4] sm:$0xf]
    %v152 = vld [vmem:[#allocation2 + $0xf8] sm:$0xf]
    %v153 = vld [vmem:[#allocation2 + $0xfc] sm:$0xf]
    %v154 = vld [vmem:[#allocation2 + $0x100] sm:$0xf]
    %v155 = vld [vmem:[#allocation2 + $0x104] sm:$0xf]
    %v156 = vld [vmem:[#allocation2 + $0x108] sm:$0xf]
    %v157 = vld [vmem:[#allocation2 + $0x10c] sm:$0xf]
    %v158 = vld [vmem:[#allocation2 + $0x110] sm:$0xf]
    %v159 = vld [vmem:[#allocation2 + $0x114] sm:$0xf]
    %v160 = vld [vmem:[#allocation2 + $0x118] sm:$0xf]
    %v161 = vld [vmem:[#allocation2 + $0x11c] sm:$0xf]
    %v162 = vld [vmem:[#allocation2 + $0x120] sm:$0xf]
    %v163 = vld [vmem:[#allocation2 + $0x124] sm:$0xf]
    %v164 = vld [vmem:[#allocation2 + $0x128] sm:$0xf]
    %v165 = vld [vmem:[#allocation2 + $0x12c] sm:$0xf]
    %v166 = vld [vmem:[#allocation2 + $0x130] sm:$0xf]
    %v167 = vld [vmem:[#allocation2 + $0x134] sm:$0xf]
    %v168 = vld [vmem:[#allocation2 + $0x138] sm:$0xf]
    %v169 = vld [vmem:[#allocation2 + $0x13c] sm:$0xf]
    %v170 = vld [vmem:[#allocation2 + $0x140] sm:$0xf]
    %v171 = vld [vmem:[#allocation2 + $0x144] sm:$0xf]
    %v172 = vld [vmem:[#allocation2 + $0x148] sm:$0xf]
    %v173 = vld [vmem:[#allocation2 + $0x14c] sm:$0xf]
    %v174 = vld [vmem:[#allocation2 + $0x150] sm:$0xf]
    %v175 = vld [vmem:[#allocation2 + $0x154] sm:$0xf]
    %v176 = vld [vmem:[#allocation2 + $0x158] sm:$0xf]
    %v177 = vld [vmem:[#allocation2 + $0x15c] sm:$0xf]
    %v178 = vld [vmem:[#allocation2 + $0x160] sm:$0xf]
    %v179 = vld [vmem:[#allocation2 + $0x164] sm:$0xf]
    %v180 = vld [vmem:[#allocation2 + $0x168] sm:$0xf]
    %v181 = vld [vmem:[#allocation2 + $0x16c] sm:$0xf]
    %v182 = vld [vmem:[#allocation2 + $0x170] sm:$0xf]
    %v183 = vld [vmem:[#allocation2 + $0x174] sm:$0xf]
    %v184 = vld [vmem:[#allocation2 + $0x178] sm:$0xf]
    %v185 = vld [vmem:[#allocation2 + $0x17c] sm:$0xf]
    %v186 = vld [vmem:[#allocation2 + $0x180] sm:$0xf]
    %v187 = vld [vmem:[#allocation2 + $0x184] sm:$0xf]
    %v188 = vld [vmem:[#allocation2 + $0x188] sm:$0xf]
    %v189 = vld [vmem:[#allocation2 + $0x18c] sm:$0xf]
    %v190 = vld [vmem:[#allocation2 + $0x190] sm:$0xf]
    %v191 = vld [vmem:[#allocation2 + $0x194] sm:$0xf]
    %v192 = vld [vmem:[#allocation2 + $0x198] sm:$0xf]
    %v193 = vld [vmem:[#allocation2 + $0x19c] sm:$0xf]
    %v194 = vld [vmem:[#allocation2 + $0x1a0] sm:$0xf]
    %v195 = vld [vmem:[#allocation2 + $0x1a4] sm:$0xf]
    %v196 = vld [vmem:[#allocation2 + $0x1a8] sm:$0xf]
    %v197 = vld [vmem:[#allocation2 + $0x1ac] sm:$0xf]
    %v198 = vld [vmem:[#allocation2 + $0x1b0] sm:$0xf]
    %v199 = vld [vmem:[#allocation2 + $0x1b4] sm:$0xf]
    %v200 = vld [vmem:[#allocation2 + $0x1b8] sm:$0xf]
    %v201 = vld [vmem:[#allocation2 + $0x1bc] sm:$0xf]
    %v202 = vld [vmem:[#allocation2 + $0x1c0] sm:$0xf]
    %v203 = vld [vmem:[#allocation2 + $0x1c4] sm:$0xf]
    %v204 = vld [vmem:[#allocation2 + $0x1c8] sm:$0xf]
    %v205 = vld [vmem:[#allocation2 + $0x1cc] sm:$0xf]
    %v206 = vld [vmem:[#allocation2 + $0x1d0] sm:$0xf]
    %v207 = vld [vmem:[#allocation2 + $0x1d4] sm:$0xf]
    %v208 = vld [vmem:[#allocation2 + $0x1d8] sm:$0xf]
    %v209 = vld [vmem:[#allocation2 + $0x1dc] sm:$0xf]
    %v210 = vld [vmem:[#allocation2 + $0x1e0] sm:$0xf]
    %v211 = vld [vmem:[#allocation2 + $0x1e4] sm:$0xf]
    %v212 = vld [vmem:[#allocation2 + $0x1e8] sm:$0xf]
    %v213 = vld [vmem:[#allocation2 + $0x1ec] sm:$0xf]
    %v214 = vld [vmem:[#allocation2 + $0x1f0] sm:$0xf]
    %v215 = vld [vmem:[#allocation2 + $0x1f4] sm:$0xf]
    %v216 = vld [vmem:[#allocation2 + $0x1f8] sm:$0xf]
    %v217 = vld [vmem:[#allocation2 + $0x1fc] sm:$0xf]
    %v218 = vld [vmem:[%s2] sm:$0x1]
    %v220 = vlaneseq
    %v221 = vshrl.u32 %v220, 7
    %v222 = vsub.s32 0, %v221
    %v223 = vrot.slane %v218, %v222
    %v353 = vunpack.c.l.b16 %v90
    %v354 = vunpack.c.l.b16 %v91
    %v355 = vunpack.c.l.b16 %v92
    %v356 = vunpack.c.l.b16 %v93
    %v357 = vunpack.c.l.b16 %v94
    %v358 = vunpack.c.l.b16 %v95
    %v359 = vunpack.c.l.b16 %v96
    %v360 = vunpack.c.l.b16 %v97
    %v361 = vunpack.c.l.b16 %v98
    %v362 = vunpack.c.l.b16 %v99
    %v363 = vunpack.c.l.b16 %v100
    %v364 = vunpack.c.l.b16 %v101
    %v365 = vunpack.c.l.b16 %v102
    %v366 = vunpack.c.l.b16 %v103
    %v367 = vunpack.c.l.b16 %v104
    %v368 = vunpack.c.l.b16 %v105
    %v369 = vunpack.c.l.b16 %v106
    %v370 = vunpack.c.l.b16 %v107
    %v371 = vunpack.c.l.b16 %v108
    %v372 = vunpack.c.l.b16 %v109
    %v373 = vunpack.c.l.b16 %v110
    %v374 = vunpack.c.l.b16 %v111
    %v375 = vunpack.c.l.b16 %v112
    %v376 = vunpack.c.l.b16 %v113
    %v377 = vunpack.c.l.b16 %v114
    %v378 = vunpack.c.l.b16 %v115
    %v379 = vunpack.c.l.b16 %v116
    %v380 = vunpack.c.l.b16 %v117
    %v381 = vunpack.c.l.b16 %v118
    %v382 = vunpack.c.l.b16 %v119
    %v383 = vunpack.c.l.b16 %v120
    %v384 = vunpack.c.l.b16 %v121
    %v385 = vunpack.c.l.b16 %v122
    %v386 = vunpack.c.l.b16 %v123
    %v387 = vunpack.c.l.b16 %v124
    %v388 = vunpack.c.l.b16 %v125
    %v389 = vunpack.c.l.b16 %v126
    %v390 = vunpack.c.l.b16 %v127
    %v391 = vunpack.c.l.b16 %v128
    %v392 = vunpack.c.l.b16 %v129
    %v393 = vunpack.c.l.b16 %v130
    %v394 = vunpack.c.l.b16 %v131
    %v395 = vunpack.c.l.b16 %v132
    %v396 = vunpack.c.l.b16 %v133
    %v397 = vunpack.c.l.b16 %v134
    %v398 = vunpack.c.l.b16 %v135
    %v399 = vunpack.c.l.b16 %v136
    %v400 = vunpack.c.l.b16 %v137
    %v401 = vunpack.c.l.b16 %v138
    %v402 = vunpack.c.l.b16 %v139
    %v403 = vunpack.c.l.b16 %v140
    %v404 = vunpack.c.l.b16 %v141
    %v405 = vunpack.c.l.b16 %v142
    %v406 = vunpack.c.l.b16 %v143
    %v407 = vunpack.c.l.b16 %v144
    %v408 = vunpack.c.l.b16 %v145
    %v409 = vunpack.c.l.b16 %v146
    %v410 = vunpack.c.l.b16 %v147
    %v411 = vunpack.c.l.b16 %v148
    %v412 = vunpack.c.l.b16 %v149
    %v413 = vunpack.c.l.b16 %v150
    %v414 = vunpack.c.l.b16 %v151
    %v415 = vunpack.c.l.b16 %v152
    %v416 = vunpack.c.l.b16 %v153
    %v417 = vunpack.c.l.b16 %v154
    %v418 = vunpack.c.l.b16 %v155
    %v419 = vunpack.c.l.b16 %v156
    %v420 = vunpack.c.l.b16 %v157
    %v421 = vunpack.c.l.b16 %v158
    %v422 = vunpack.c.l.b16 %v159
    %v423 = vunpack.c.l.b16 %v160
    %v424 = vunpack.c.l.b16 %v161
    %v425 = vunpack.c.l.b16 %v162
    %v426 = vunpack.c.l.b16 %v163
    %v427 = vunpack.c.l.b16 %v164
    %v428 = vunpack.c.l.b16 %v165
    %v429 = vunpack.c.l.b16 %v166
    %v430 = vunpack.c.l.b16 %v167
    %v431 = vunpack.c.l.b16 %v168
    %v432 = vunpack.c.l.b16 %v169
    %v433 = vunpack.c.l.b16 %v170
    %v434 = vunpack.c.l.b16 %v171
    %v435 = vunpack.c.l.b16 %v172
    %v436 = vunpack.c.l.b16 %v173
    %v437 = vunpack.c.l.b16 %v174
    %v438 = vunpack.c.l.b16 %v175
    %v439 = vunpack.c.l.b16 %v176
    %v440 = vunpack.c.l.b16 %v177
    %v441 = vunpack.c.l.b16 %v178
    %v442 = vunpack.c.l.b16 %v179
    %v443 = vunpack.c.l.b16 %v180
    %v444 = vunpack.c.l.b16 %v181
    %v445 = vunpack.c.l.b16 %v182
    %v446 = vunpack.c.l.b16 %v183
    %v447 = vunpack.c.l.b16 %v184
    %v448 = vunpack.c.l.b16 %v185
    %v449 = vunpack.c.l.b16 %v186
    %v450 = vunpack.c.l.b16 %v187
    %v451 = vunpack.c.l.b16 %v188
    %v452 = vunpack.c.l.b16 %v189
    %v453 = vunpack.c.l.b16 %v190
    %v454 = vunpack.c.l.b16 %v191
    %v455 = vunpack.c.l.b16 %v192
    %v456 = vunpack.c.l.b16 %v193
    %v457 = vunpack.c.l.b16 %v194
    %v458 = vunpack.c.l.b16 %v195
    %v459 = vunpack.c.l.b16 %v196
    %v460 = vunpack.c.l.b16 %v197
    %v461 = vunpack.c.l.b16 %v198
    %v462 = vunpack.c.l.b16 %v199
    %v463 = vunpack.c.l.b16 %v200
    %v464 = vunpack.c.l.b16 %v201
    %v465 = vunpack.c.l.b16 %v202
    %v466 = vunpack.c.l.b16 %v203
    %v467 = vunpack.c.l.b16 %v204
    %v468 = vunpack.c.l.b16 %v205
    %v469 = vunpack.c.l.b16 %v206
    %v470 = vunpack.c.l.b16 %v207
    %v471 = vunpack.c.l.b16 %v208
    %v472 = vunpack.c.l.b16 %v209
    %v473 = vunpack.c.l.b16 %v210
    %v474 = vunpack.c.l.b16 %v211
    %v475 = vunpack.c.l.b16 %v212
    %v476 = vunpack.c.l.b16 %v213
    %v477 = vunpack.c.l.b16 %v214
    %v478 = vunpack.c.l.b16 %v215
    %v479 = vunpack.c.l.b16 %v216
    %v480 = vunpack.c.l.b16 %v217
    %v481 = vpack.c.b16 %v354, %v353
    %v482 = vpack.c.b16 %v356, %v355
    %v483 = vpack.c.b16 %v358, %v357
    %v484 = vpack.c.b16 %v360, %v359
    %v485 = vpack.c.b16 %v362, %v361
    %v486 = vpack.c.b16 %v364, %v363
    %v487 = vpack.c.b16 %v366, %v365
    %v488 = vpack.c.b16 %v368, %v367
    %v489 = vpack.c.b16 %v370, %v369
    %v490 = vpack.c.b16 %v372, %v371
    %v491 = vpack.c.b16 %v374, %v373
    %v492 = vpack.c.b16 %v376, %v375
    %v493 = vpack.c.b16 %v378, %v377
    %v494 = vpack.c.b16 %v380, %v379
    %v495 = vpack.c.b16 %v382, %v381
    %v496 = vpack.c.b16 %v384, %v383
    %v497 = vpack.c.b16 %v386, %v385
    %v498 = vpack.c.b16 %v388, %v387
    %v499 = vpack.c.b16 %v390, %v389
    %v500 = vpack.c.b16 %v392, %v391
    %v501 = vpack.c.b16 %v394, %v393
    %v502 = vpack.c.b16 %v396, %v395
    %v503 = vpack.c.b16 %v398, %v397
    %v504 = vpack.c.b16 %v400, %v399
    %v505 = vpack.c.b16 %v402, %v401
    %v506 = vpack.c.b16 %v404, %v403
    %v507 = vpack.c.b16 %v406, %v405
    %v508 = vpack.c.b16 %v408, %v407
    %v509 = vpack.c.b16 %v410, %v409
    %v510 = vpack.c.b16 %v412, %v411
    %v511 = vpack.c.b16 %v414, %v413
    %v512 = vpack.c.b16 %v416, %v415
    %v513 = vpack.c.b16 %v418, %v417
    %v514 = vpack.c.b16 %v420, %v419
    %v515 = vpack.c.b16 %v422, %v421
    %v516 = vpack.c.b16 %v424, %v423
    %v517 = vpack.c.b16 %v426, %v425
    %v518 = vpack.c.b16 %v428, %v427
    %v519 = vpack.c.b16 %v430, %v429
    %v520 = vpack.c.b16 %v432, %v431
    %v521 = vpack.c.b16 %v434, %v433
    %v522 = vpack.c.b16 %v436, %v435
    %v523 = vpack.c.b16 %v438, %v437
    %v524 = vpack.c.b16 %v440, %v439
    %v525 = vpack.c.b16 %v442, %v441
    %v526 = vpack.c.b16 %v444, %v443
    %v527 = vpack.c.b16 %v446, %v445
    %v528 = vpack.c.b16 %v448, %v447
    %v529 = vpack.c.b16 %v450, %v449
    %v530 = vpack.c.b16 %v452, %v451
    %v531 = vpack.c.b16 %v454, %v453
    %v532 = vpack.c.b16 %v456, %v455
    %v533 = vpack.c.b16 %v458, %v457
    %v534 = vpack.c.b16 %v460, %v459
    %v535 = vpack.c.b16 %v462, %v461
    %v536 = vpack.c.b16 %v464, %v463
    %v537 = vpack.c.b16 %v466, %v465
    %v538 = vpack.c.b16 %v468, %v467
    %v539 = vpack.c.b16 %v470, %v469
    %v540 = vpack.c.b16 %v472, %v471
    %v541 = vpack.c.b16 %v474, %v473
    %v542 = vpack.c.b16 %v476, %v475
    %v543 = vpack.c.b16 %v478, %v477
    %v544 = vpack.c.b16 %v480, %v479
    %609 = vmatprep.subr.bf16.mxu0 0
    %610 = vmatpush1.bf16.msra.mxu0 %v481
    %611 = vmatprep.subr.bf16.mxu0 0
    %612 = vmatpush1.bf16.msra.mxu0 %v482
    %613 = vmatprep.subr.bf16.mxu0 0
    %614 = vmatpush1.bf16.msra.mxu0 %v483
    %615 = vmatprep.subr.bf16.mxu0 0
    %616 = vmatpush1.bf16.msra.mxu0 %v484
    %617 = vmatprep.subr.bf16.mxu0 0
    %618 = vmatpush1.bf16.msra.mxu0 %v485
    %619 = vmatprep.subr.bf16.mxu0 0
    %620 = vmatpush1.bf16.msra.mxu0 %v486
    %621 = vmatprep.subr.bf16.mxu0 0
    %622 = vmatpush1.bf16.msra.mxu0 %v487
    %623 = vmatprep.subr.bf16.mxu0 0
    %624 = vmatpush1.bf16.msra.mxu0 %v488
    %625 = vmatprep.subr.bf16.mxu0 0
    %626 = vmatpush1.bf16.msra.mxu0 %v489
    %627 = vmatprep.subr.bf16.mxu0 0
    %628 = vmatpush1.bf16.msra.mxu0 %v490
    %629 = vmatprep.subr.bf16.mxu0 0
    %630 = vmatpush1.bf16.msra.mxu0 %v491
    %631 = vmatprep.subr.bf16.mxu0 0
    %632 = vmatpush1.bf16.msra.mxu0 %v492
    %633 = vmatprep.subr.bf16.mxu0 0
    %634 = vmatpush1.bf16.msra.mxu0 %v493
    %635 = vmatprep.subr.bf16.mxu0 0
    %636 = vmatpush1.bf16.msra.mxu0 %v494
    %637 = vmatprep.subr.bf16.mxu0 0
    %638 = vmatpush1.bf16.msra.mxu0 %v495
    %639 = vmatprep.subr.bf16.mxu0 0
    %640 = vmatpush1.bf16.msra.mxu0 %v496
    %641 = vmatprep.mubr.bf16.mxu0 %v83
    %642 = vmatmul.mubr.bf16.gmra.mrb[0].mxu0 %v82
    %v643 = vpop.f32.mrb[0].mxu0
    %v644 = vadd.f32 %v223, %v643
    %v645 = vpop.f32.mrb[0].mxu0
    %v646 = vpop.f32.mrb[0].mxu0
    %v647 = vpop.f32.mrb[0].mxu0
    %648 = vdwg.mxu0
    %649 = vmatprep.subr.bf16.mxu0 0
    %650 = vmatpush1.bf16.msra.mxu0 %v497
    %651 = vmatprep.subr.bf16.mxu0 0
    %652 = vmatpush1.bf16.msra.mxu0 %v498
    %653 = vmatprep.subr.bf16.mxu0 0
    %654 = vmatpush1.bf16.msra.mxu0 %v499
    %655 = vmatprep.subr.bf16.mxu0 0
    %656 = vmatpush1.bf16.msra.mxu0 %v500
    %657 = vmatprep.subr.bf16.mxu0 0
    %658 = vmatpush1.bf16.msra.mxu0 %v501
    %659 = vmatprep.subr.bf16.mxu0 0
    %660 = vmatpush1.bf16.msra.mxu0 %v502
    %661 = vmatprep.subr.bf16.mxu0 0
    %662 = vmatpush1.bf16.msra.mxu0 %v503
    %663 = vmatprep.subr.bf16.mxu0 0
    %664 = vmatpush1.bf16.msra.mxu0 %v504
    %665 = vmatprep.subr.bf16.mxu0 0
    %666 = vmatpush1.bf16.msra.mxu0 %v505
    %667 = vmatprep.subr.bf16.mxu0 0
    %668 = vmatpush1.bf16.msra.mxu0 %v506
    %669 = vmatprep.subr.bf16.mxu0 0
    %670 = vmatpush1.bf16.msra.mxu0 %v507
    %671 = vmatprep.subr.bf16.mxu0 0
    %672 = vmatpush1.bf16.msra.mxu0 %v508
    %673 = vmatprep.subr.bf16.mxu0 0
    %674 = vmatpush1.bf16.msra.mxu0 %v509
    %675 = vmatprep.subr.bf16.mxu0 0
    %676 = vmatpush1.bf16.msra.mxu0 %v510
    %677 = vmatprep.subr.bf16.mxu0 0
    %678 = vmatpush1.bf16.msra.mxu0 %v511
    %679 = vmatprep.subr.bf16.mxu0 0
    %680 = vmatpush1.bf16.msra.mxu0 %v512
    %681 = vmatprep.mubr.bf16.mxu0 %v85
    %682 = vmatmul.mubr.bf16.gmra.mrb[0].mxu0 %v84
    %v683 = vpop.f32.mrb[0].mxu0
    %v684 = vadd.f32 %v644, %v683
    %v685 = vpop.f32.mrb[0].mxu0
    %v686 = vpop.f32.mrb[0].mxu0
    %v687 = vpop.f32.mrb[0].mxu0
    %688 = vdwg.mxu0
    %689 = vmatprep.subr.bf16.mxu0 0
    %690 = vmatpush1.bf16.msra.mxu0 %v513
    %691 = vmatprep.subr.bf16.mxu0 0
    %692 = vmatpush1.bf16.msra.mxu0 %v514
    %693 = vmatprep.subr.bf16.mxu0 0
    %694 = vmatpush1.bf16.msra.mxu0 %v515
    %695 = vmatprep.subr.bf16.mxu0 0
    %696 = vmatpush1.bf16.msra.mxu0 %v516
    %697 = vmatprep.subr.bf16.mxu0 0
    %698 = vmatpush1.bf16.msra.mxu0 %v517
    %699 = vmatprep.subr.bf16.mxu0 0
    %700 = vmatpush1.bf16.msra.mxu0 %v518
    %701 = vmatprep.subr.bf16.mxu0 0
    %702 = vmatpush1.bf16.msra.mxu0 %v519
    %703 = vmatprep.subr.bf16.mxu0 0
    %704 = vmatpush1.bf16.msra.mxu0 %v520
    %705 = vmatprep.subr.bf16.mxu0 0
    %706 = vmatpush1.bf16.msra.mxu0 %v521
    %707 = vmatprep.subr.bf16.mxu0 0
    %708 = vmatpush1.bf16.msra.mxu0 %v522
    %709 = vmatprep.subr.bf16.mxu0 0
    %710 = vmatpush1.bf16.msra.mxu0 %v523
    %711 = vmatprep.subr.bf16.mxu0 0
    %712 = vmatpush1.bf16.msra.mxu0 %v524
    %713 = vmatprep.subr.bf16.mxu0 0
    %714 = vmatpush1.bf16.msra.mxu0 %v525
    %715 = vmatprep.subr.bf16.mxu0 0
    %716 = vmatpush1.bf16.msra.mxu0 %v526
    %717 = vmatprep.subr.bf16.mxu0 0
    %718 = vmatpush1.bf16.msra.mxu0 %v527
    %719 = vmatprep.subr.bf16.mxu0 0
    %720 = vmatpush1.bf16.msra.mxu0 %v528
    %721 = vmatprep.mubr.bf16.mxu0 %v87
    %722 = vmatmul.mubr.bf16.gmra.mrb[0].mxu0 %v86
    %v723 = vpop.f32.mrb[0].mxu0
    %v724 = vadd.f32 %v684, %v723
    %v725 = vpop.f32.mrb[0].mxu0
    %v726 = vpop.f32.mrb[0].mxu0
    %v727 = vpop.f32.mrb[0].mxu0
    %728 = vdwg.mxu0
    %729 = vmatprep.subr.bf16.mxu0 0
    %730 = vmatpush1.bf16.msra.mxu0 %v529
    %731 = vmatprep.subr.bf16.mxu0 0
    %732 = vmatpush1.bf16.msra.mxu0 %v530
    %733 = vmatprep.subr.bf16.mxu0 0
    %734 = vmatpush1.bf16.msra.mxu0 %v531
    %735 = vmatprep.subr.bf16.mxu0 0
    %736 = vmatpush1.bf16.msra.mxu0 %v532
    %737 = vmatprep.subr.bf16.mxu0 0
    %738 = vmatpush1.bf16.msra.mxu0 %v533
    %739 = vmatprep.subr.bf16.mxu0 0
    %740 = vmatpush1.bf16.msra.mxu0 %v534
    %741 = vmatprep.subr.bf16.mxu0 0
    %742 = vmatpush1.bf16.msra.mxu0 %v535
    %743 = vmatprep.subr.bf16.mxu0 0
    %744 = vmatpush1.bf16.msra.mxu0 %v536
    %745 = vmatprep.subr.bf16.mxu0 0
    %746 = vmatpush1.bf16.msra.mxu0 %v537
    %747 = vmatprep.subr.bf16.mxu0 0
    %748 = vmatpush1.bf16.msra.mxu0 %v538
    %749 = vmatprep.subr.bf16.mxu0 0
    %750 = vmatpush1.bf16.msra.mxu0 %v539
    %751 = vmatprep.subr.bf16.mxu0 0
    %752 = vmatpush1.bf16.msra.mxu0 %v540
    %753 = vmatprep.subr.bf16.mxu0 0
    %754 = vmatpush1.bf16.msra.mxu0 %v541
    %755 = vmatprep.subr.bf16.mxu0 0
    %756 = vmatpush1.bf16.msra.mxu0 %v542
    %757 = vmatprep.subr.bf16.mxu0 0
    %758 = vmatpush1.bf16.msra.mxu0 %v543
    %759 = vmatprep.subr.bf16.mxu0 0
    %760 = vmatpush1.bf16.msra.mxu0 %v544
    %761 = vmatprep.mubr.bf16.mxu0 %v89
    %762 = vmatmul.mubr.bf16.gmra.mrb[0].mxu0 %v88
    %v763 = vpop.f32.mrb[0].mxu0
    %v764 = vadd.f32 %v724, %v763
    %v765 = vpop.f32.mrb[0].mxu0
    %v766 = vpop.f32.mrb[0].mxu0
    %v767 = vpop.f32.mrb[0].mxu0
    %768 = vdwg.mxu0
    %v769 = vmax.f32 %v764, 0.0
    %v770 = vpack.c.bf16 %v769, %v769
    %v771 = vld [vmem:[%s3] sm:$0xf]
    %v772 = vld [vmem:[%s3 + $0x4] sm:$0xf]
    %v773 = vld [vmem:[%s3 + $0x8] sm:$0xf]
    %v774 = vld [vmem:[%s3 + $0xc] sm:$0xf]
    %v775 = vld [vmem:[%s3 + $0x10] sm:$0xf]
    %v776 = vld [vmem:[%s3 + $0x14] sm:$0xf]
    %v777 = vld [vmem:[%s3 + $0x18] sm:$0xf]
    %v778 = vld [vmem:[%s3 + $0x1c] sm:$0xf]
    %v779 = vld [vmem:[%s3 + $0x20] sm:$0xf]
    %v780 = vld [vmem:[%s3 + $0x24] sm:$0xf]
    %v781 = vld [vmem:[%s3 + $0x28] sm:$0xf]
    %v782 = vld [vmem:[%s3 + $0x2c] sm:$0xf]
    %v783 = vld [vmem:[%s3 + $0x30] sm:$0xf]
    %v784 = vld [vmem:[%s3 + $0x34] sm:$0xf]
    %v785 = vld [vmem:[%s3 + $0x38] sm:$0xf]
    %v786 = vld [vmem:[%s3 + $0x3c] sm:$0xf]
    %v787 = vld [vmem:[%s4] sm:$0x1]
    %v789 = vlaneseq
    %v790 = vshrl.u32 %v789, 7
    %v791 = vsub.s32 0, %v790
    %v792 = vrot.slane %v787, %v791
    %v810 = vunpack.c.l.b16 %v771
    %v811 = vunpack.c.l.b16 %v772
    %v812 = vunpack.c.l.b16 %v773
    %v813 = vunpack.c.l.b16 %v774
    %v814 = vunpack.c.l.b16 %v775
    %v815 = vunpack.c.l.b16 %v776
    %v816 = vunpack.c.l.b16 %v777
    %v817 = vunpack.c.l.b16 %v778
    %v818 = vunpack.c.l.b16 %v779
    %v819 = vunpack.c.l.b16 %v780
    %v820 = vunpack.c.l.b16 %v781
    %v821 = vunpack.c.l.b16 %v782
    %v822 = vunpack.c.l.b16 %v783
    %v823 = vunpack.c.l.b16 %v784
    %v824 = vunpack.c.l.b16 %v785
    %v825 = vunpack.c.l.b16 %v786
    %v826 = vpack.c.b16 %v811, %v810
    %v827 = vpack.c.b16 %v813, %v812
    %v828 = vpack.c.b16 %v815, %v814
    %v829 = vpack.c.b16 %v817, %v816
    %v830 = vpack.c.b16 %v819, %v818
    %v831 = vpack.c.b16 %v821, %v820
    %v832 = vpack.c.b16 %v823, %v822
    %v833 = vpack.c.b16 %v825, %v824
    %842 = vmatprep.subr.bf16.mxu0 0
    %843 = vmatpush1.bf16.msra.mxu0 %v826
    %844 = vmatprep.subr.bf16.mxu0 0
    %845 = vmatpush1.bf16.msra.mxu0 %v827
    %846 = vmatprep.subr.bf16.mxu0 0
    %847 = vmatpush1.bf16.msra.mxu0 %v828
    %848 = vmatprep.subr.bf16.mxu0 0
    %849 = vmatpush1.bf16.msra.mxu0 %v829
    %850 = vmatprep.subr.bf16.mxu0 0
    %851 = vmatpush1.bf16.msra.mxu0 %v830
    %852 = vmatprep.subr.bf16.mxu0 0
    %853 = vmatpush1.bf16.msra.mxu0 %v831
    %854 = vmatprep.subr.bf16.mxu0 0
    %855 = vmatpush1.bf16.msra.mxu0 %v832
    %856 = vmatprep.subr.bf16.mxu0 0
    %857 = vmatpush1.bf16.msra.mxu0 %v833
    %858 = vmatprep.subr.bf16.mxu0 0
    %859 = vmatpush1.bf16.msra.mxu0 0
    %860 = vmatprep.subr.bf16.mxu0 0
    %861 = vmatpush1.bf16.msra.mxu0 0
    %862 = vmatprep.subr.bf16.mxu0 0
    %863 = vmatpush1.bf16.msra.mxu0 0
    %864 = vmatprep.subr.bf16.mxu0 0
    %865 = vmatpush1.bf16.msra.mxu0 0
    %866 = vmatprep.subr.bf16.mxu0 0
    %867 = vmatpush1.bf16.msra.mxu0 0
    %868 = vmatprep.subr.bf16.mxu0 0
    %869 = vmatpush1.bf16.msra.mxu0 0
    %870 = vmatprep.subr.bf16.mxu0 0
    %871 = vmatpush1.bf16.msra.mxu0 0
    %872 = vmatprep.subr.bf16.mxu0 0
    %873 = vmatpush1.bf16.msra.mxu0 0
    %874 = vmatprep.mubr.bf16.mxu0 0
    %875 = vmatmul.mubr.bf16.gmra.mrb[0].mxu0 %v770
    %v876 = vpop.f32.mrb[0].mxu0
    %v877 = vadd.f32 %v792, %v876
    %v878 = vpop.f32.mrb[0].mxu0
    %v879 = vpop.f32.mrb[0].mxu0
    %v880 = vpop.f32.mrb[0].mxu0
    %881 = vdwg.mxu0
    %v882 = vmax.f32 %v877, 0.0
    %883 = vst [vmem:[#allocation5] sm:$0x3] %v882
    // Predicated region
    $region26: #{_forward_impl.1} parent=1 // pred_check
      _
    $region27: #{_forward_impl.1} parent=1 // pred_check_branch
      %885 = sbr.rel (0) target = $region29
    $region28: #{_forward_impl.1} parent=1 // pred_region
      %s887 = ssub.s32 32, 32
      %888 = vsyncadd [#allocation4], %s887
      %s890 = sshll.u32 [#allocation5], 4
      %s891 = int_to_ptr.vmem [resolvable:$true] %s890
      %893 = dma.vmem_to_hbm [thread:$0]  %s891, 32, %s5, [#allocation4]
    $region29: #{_forward_impl.1} parent=1 // pred_fallthru
      _
    // Predicated region
    $region30: #{_forward_impl.1} parent=1 // pred_check
      _
    $region31: #{_forward_impl.1} parent=1 // pred_check_branch
      %895 = sbr.rel (0) target = $region33
    $region32: #{_forward_impl.1} parent=1 // pred_region
      %896 = dma.done [#allocation4], 32
    $region33: #{_forward_impl.1} parent=1 // pred_fallthru
      _
    %897 = vsyncpa [#allocation3], 1
    %898 = vsyncpa [#allocation4], 1

</llo_original>
